<compile_context>
chip_gen: v7x
topology: tpu7x:2x2x1
jax: 0.10.0
libtpu: 0.0.40
codegen_flags: <defaults>
</compile_context>

<pallas_src>
import functools

import jax
import jax.numpy as jnp
from jax.experimental import pallas as pl
from jax.experimental.pallas import tpu as pltpu


def _label_smoothing_kernel(tgt_ref, pred_ref, out_ref, *,
                            eps, n_class, n_total, block_rows):
    i = pl.program_id(0)

    pred = pred_ref[...].astype(jnp.float32)               # (TM, C)
    tgt = tgt_ref[...]                                      # (TM, 1) int32

    # Numerically-stable log-sum-exp (lane-axis reductions over C).
    m = jnp.max(pred, axis=1, keepdims=True)                # (TM, 1)
    shifted = pred - m                                      # (TM, C)
    lse = jnp.log(jnp.sum(jnp.exp(shifted), axis=1, keepdims=True))  # (TM, 1)

    # Smoothed-CE weights: target class gets (1 - eps), the rest eps/(C-1);
    # weights sum to 1, so  row_loss = lse - sum_j w_j * shifted_j.
    # One select + one multiply + ONE lane reduction (fused).
    w_rest = eps / (n_class - 1)
    w_tgt = 1.0 - eps
    # (1, C) class-index row broadcast against the (TM, 1) targets: no full
    # (TM, C) int32 iota is materialized per grid step.
    col = jax.lax.broadcasted_iota(jnp.int32, (1, n_class), 1)
    w = jnp.where(col == tgt, jnp.float32(w_tgt), jnp.float32(w_rest))  # (TM, C)
    wsum = jnp.sum(w * shifted, axis=1, keepdims=True)       # (TM, 1)

    row_loss = lse - wsum                                    # (TM, 1)

    # Zero batch-padding rows, then collapse this tile to one partial sum.
    row = jax.lax.broadcasted_iota(jnp.int32, (block_rows, 1), 0) + i * block_rows
    row_loss = jnp.where(row < n_total, row_loss, 0.0)
    partial = jnp.sum(row_loss, axis=0, keepdims=True)       # (1, 1)

    # Lane-dense output: one full (8, 128) block per grid step, the partial
    # sum in element [0, 0] and zeros elsewhere (final sum ignores the zeros).
    r = jax.lax.broadcasted_iota(jnp.int32, (8, 128), 0)
    c = jax.lax.broadcasted_iota(jnp.int32, (8, 128), 1)
    out_ref[...] = jnp.where((r == 0) & (c == 0), partial, 0.0)


def _per_core_vmem_bytes():
    """Conservative per-TensorCore VMEM capacity.

    get_tpu_info() may report per-chip capacity on multi-TensorCore parts
    (v7x), so clamp to 64 MiB; v5e/v6e have 128 MiB but our ~4 MiB tile
    target never needs the extra headroom.
    """
    cap = 64 << 20
    try:
        cap = int(pltpu.get_tpu_info().vmem_capacity_bytes)
    except Exception:
        pass
    return min(cap, 64 << 20)


def _vmem_bytes_needed(br, c, itemsize):
    # 2 pipeline buffers of the logits tile + ~3 live f32 (br, C) temporaries
    # in the body (shifted, exp(shifted), weighted product) + targets/output.
    return (2 * br * c * itemsize) + (3 * br * c * 4) + (4 * br * 4) + (1 << 20)


def _pick_block_rows(n, c, itemsize):
    sub = 8 if itemsize >= 4 else 16          # sublane tile (f32 vs bf16/f16)

    # VMEM constraint: keep everything (inputs + body temporaries) in ~55%
    # of per-TC VMEM, leaving room for compiler scratch.
    budget = int(_per_core_vmem_bytes() * 0.55)
    bytes_per_row = c * (2 * itemsize + 3 * 4) + 16
    br_vmem = budget // max(bytes_per_row, 1)

    # Bandwidth constraint: ~4 MiB of logits per tile is enough to amortize
    # the per-grid-step overhead and sit at the HBM roofline; bigger buys
    # little and competes with double-buffering.
    br_target = (4 << 20) // max(c * itemsize, 1)

    br = max(1, min(br_vmem, br_target))
    br = min(br, pl.cdiv(n, sub) * sub)       # don't exceed the padded batch
    br = max(sub, (br // sub) * sub)          # round to the sublane tile
    return int(br)


def label_smoothing_loss(logits, target, *, smoothing_ratio, block_rows=None):
    """loss = -(smoothed_one_hot * log_softmax(logits)).sum(1).mean()"""
    n, c = logits.shape
    itemsize = jnp.dtype(logits.dtype).itemsize
    sub = 8 if itemsize >= 4 else 16

    if block_rows is None:
        br = _pick_block_rows(n, c, itemsize)
    else:
        br = max(sub, (int(block_rows) // sub) * sub)

    n_tiles = pl.cdiv(n, br)
    n_pad = n_tiles * br

    tgt2d = target.astype(jnp.int32).reshape(n, 1)
    if n_pad != n:
        logits = jnp.pad(logits, ((0, n_pad - n), (0, 0)))
        tgt2d = jnp.pad(tgt2d, ((0, n_pad - n), (0, 0)))

    kernel = functools.partial(
        _label_smoothing_kernel,
        eps=float(smoothing_ratio),
        n_class=int(c),
        n_total=int(n),
        block_rows=br,
    )

    # Cap the scoped limit at 60 MiB: safe on every generation (v7x has
    # 64 MiB per TensorCore); the auto-picked tile never gets close.
    vmem_need = _vmem_bytes_needed(br, c, itemsize)
    vmem_limit = int(min(max(vmem_need, 16 << 20), 60 << 20))

    partials = pl.pallas_call(
        kernel,
        out_shape=jax.ShapeDtypeStruct((n_tiles * 8, 128), jnp.float32),
        grid_spec=pltpu.PrefetchScalarGridSpec(
            num_scalar_prefetch=0,
            grid=(n_tiles,),
            in_specs=[
                pl.BlockSpec((br, 1), lambda i: (i, 0)),   # targets
                pl.BlockSpec((br, c), lambda i: (i, 0)),   # logits
            ],
            out_specs=pl.BlockSpec((8, 128), lambda i: (i, 0)),
        ),
        compiler_params=pltpu.CompilerParams(
            dimension_semantics=("parallel",),
            vmem_limit_bytes=vmem_limit,
        ),
    )(tgt2d, logits)

    # Tiny final reduction (n_tiles partial sums, rest are zeros) done by XLA.
    return jnp.sum(partials) / jnp.float32(n)


def _reference_loss(logits, target, eps):
    c = logits.shape[1]
    one_hot = jax.nn.one_hot(target, c, dtype=jnp.float32)
    one_hot = one_hot * (1 - eps) + (1 - one_hot) * eps / (c - 1)
    log_prb = jax.nn.log_softmax(logits.astype(jnp.float32), axis=1)
    return -(one_hot * log_prb).sum(axis=1).mean()


if __name__ == "__main__":
    key = jax.random.PRNGKey(0)
    k1, k2, k3, k4, k5, k6, k7, k8 = jax.random.split(key, 8)

    # Case 1: small, aligned batch (auto tile size).
    N1, C1, eps1 = 16, 32, 0.1
    logits1 = jax.random.normal(k1, (N1, C1), dtype=jnp.float32)
    target1 = jax.random.randint(k2, (N1,), 0, C1, dtype=jnp.int32)
    loss1 = label_smoothing_loss(logits1, target1, smoothing_ratio=eps1)
    jax.block_until_ready(loss1)
    ref1 = _reference_loss(logits1, target1, eps1)
    assert jnp.allclose(loss1, ref1, atol=1e-5, rtol=1e-5), (loss1, ref1)

    # Case 2: ragged batch (exercises padding + in-kernel row mask).
    N2, C2, eps2 = 13, 32, 0.2
    logits2 = jax.random.normal(k3, (N2, C2), dtype=jnp.float32)
    target2 = jax.random.randint(k4, (N2,), 0, C2, dtype=jnp.int32)
    loss2 = label_smoothing_loss(logits2, target2, smoothing_ratio=eps2)
    jax.block_until_ready(loss2)
    ref2 = _reference_loss(logits2, target2, eps2)
    assert jnp.allclose(loss2, ref2, atol=1e-5, rtol=1e-5), (loss2, ref2)

    # Case 3: multi-tile grid (exercises the parallel axis + per-tile partials).
    N3, C3, eps3 = 24, 32, 0.05
    logits3 = jax.random.normal(k5, (N3, C3), dtype=jnp.float32)
    target3 = jax.random.randint(k6, (N3,), 0, C3, dtype=jnp.int32)
    loss3 = label_smoothing_loss(logits3, target3, smoothing_ratio=eps3,
                                 block_rows=8)
    jax.block_until_ready(loss3)
    ref3 = _reference_loss(logits3, target3, eps3)
    assert jnp.allclose(loss3, ref3, atol=1e-5, rtol=1e-5), (loss3, ref3)

    # Case 4: bf16 logits kept in bf16 in HBM (upcast happens in-kernel),
    # ragged batch with 16-row sublane rounding.
    N4, C4, eps4 = 40, 32, 0.1
    logits4 = jax.random.normal(k7, (N4, C4), dtype=jnp.float32).astype(jnp.bfloat16)
    target4 = jax.random.randint(k8, (N4,), 0, C4, dtype=jnp.int32)
    loss4 = label_smoothing_loss(logits4, target4, smoothing_ratio=eps4)
    jax.block_until_ready(loss4)
    ref4 = _reference_loss(logits4, target4, eps4)
    assert jnp.allclose(loss4, ref4, atol=1e-5, rtol=1e-4), (loss4, ref4)

    print("KERNEL_OK")
</pallas_src>

<mosaic_0001>
module attributes {stable_mosaic.version = 11 : i64} {
  func.func @_label_smoothing_kernel(%arg0: i32, %arg1: memref<16x1xi32, #tpu.memory_space<vmem>>, %arg2: memref<16x32xf32, #tpu.memory_space<vmem>>, %arg3: memref<8x128xf32, #tpu.memory_space<vmem>>) attributes {dimension_semantics = [#tpu.dimension_semantics<parallel>], iteration_bounds = array<i64: 1>, scalar_prefetch = 0 : i64, scratch_operands = 0 : i64, tpu.core_type = #tpu.core_type<tc>, window_params = [{transform_indices = @transform_0, window_bounds = array<i64: 16, 1>}, {transform_indices = @transform_1, window_bounds = array<i64: 16, 32>}, {transform_indices = @transform_2, window_bounds = array<i64: 8, 128>}]} {
    %c0 = arith.constant 0 : index
    %c0_0 = arith.constant 0 : index
    %0 = vector.load %arg2[%c0, %c0_0] : memref<16x32xf32, #tpu.memory_space<vmem>>, vector<16x32xf32>
    %c0_1 = arith.constant 0 : index
    %c0_2 = arith.constant 0 : index
    %1 = vector.load %arg1[%c0_1, %c0_2] : memref<16x1xi32, #tpu.memory_space<vmem>>, vector<16x1xi32>
    %cst = arith.constant dense<0xFF800000> : vector<16xf32>
    %2 = vector.multi_reduction <maximumf>, %0, %cst [1] : vector<16x32xf32> to vector<16xf32>
    %3 = vector.shape_cast %2 : vector<16xf32> to vector<16x1xf32>
    %4 = vector.broadcast %3 : vector<16x1xf32> to vector<16x32xf32>
    %5 = arith.subf %0, %4 : vector<16x32xf32>
    %6 = math.exp %5 : vector<16x32xf32>
    %cst_3 = arith.constant dense<0.000000e+00> : vector<16xf32>
    %7 = vector.multi_reduction <add>, %6, %cst_3 [1] : vector<16x32xf32> to vector<16xf32>
    %8 = vector.shape_cast %7 : vector<16xf32> to vector<16x1xf32>
    %9 = math.log %8 : vector<16x1xf32>
    %10 = tpu.iota {dimensions = array<i32: 1>} : vector<1x32xi32>
    %11 = vector.broadcast %10 : vector<1x32xi32> to vector<16x32xi32>
    %12 = vector.broadcast %1 : vector<16x1xi32> to vector<16x32xi32>
    %13 = arith.cmpi eq, %11, %12 : vector<16x32xi32>
    %cst_4 = arith.constant 0.899999976 : f32
    %cst_5 = arith.constant 0.0032258064 : f32
    %14 = vector.broadcast %cst_4 : f32 to vector<16x32xf32>
    %15 = vector.broadcast %cst_5 : f32 to vector<16x32xf32>
    %16 = arith.select %13, %14, %15 : vector<16x32xi1>, vector<16x32xf32>
    %17 = arith.mulf %16, %5 : vector<16x32xf32>
    %cst_6 = arith.constant dense<0.000000e+00> : vector<16xf32>
    %18 = vector.multi_reduction <add>, %17, %cst_6 [1] : vector<16x32xf32> to vector<16xf32>
    %19 = vector.shape_cast %18 : vector<16xf32> to vector<16x1xf32>
    %20 = arith.subf %9, %19 : vector<16x1xf32>
    %21 = tpu.iota {dimensions = array<i32: 0>} : vector<16x1xi32>
    %c16_i32 = arith.constant 16 : i32
    %22 = arith.muli %arg0, %c16_i32 : i32
    %23 = vector.broadcast %22 : i32 to vector<16x1xi32>
    %24 = arith.addi %21, %23 : vector<16x1xi32>
    %c16_i32_7 = arith.constant 16 : i32
    %25 = vector.broadcast %c16_i32_7 : i32 to vector<16x1xi32>
    %26 = arith.cmpi slt, %24, %25 : vector<16x1xi32>
    %cst_8 = arith.constant 0.000000e+00 : f32
    %27 = vector.broadcast %cst_8 : f32 to vector<16x1xf32>
    %28 = arith.select %26, %20, %27 : vector<16x1xi1>, vector<16x1xf32>
    %cst_9 = arith.constant dense<0.000000e+00> : vector<1xf32>
    %29 = vector.multi_reduction <add>, %28, %cst_9 [0] : vector<16x1xf32> to vector<1xf32>
    %30 = vector.shape_cast %29 : vector<1xf32> to vector<1x1xf32>
    %31 = tpu.iota {dimensions = array<i32: 0>} : vector<8x128xi32>
    %32 = tpu.iota {dimensions = array<i32: 1>} : vector<8x128xi32>
    %c0_i32 = arith.constant 0 : i32
    %33 = vector.broadcast %c0_i32 : i32 to vector<8x128xi32>
    %34 = arith.cmpi eq, %31, %33 : vector<8x128xi32>
    %c0_i32_10 = arith.constant 0 : i32
    %35 = vector.broadcast %c0_i32_10 : i32 to vector<8x128xi32>
    %36 = arith.cmpi eq, %32, %35 : vector<8x128xi32>
    %37 = arith.andi %34, %36 : vector<8x128xi1>
    %cst_11 = arith.constant 0.000000e+00 : f32
    %38 = vector.shape_cast %30 : vector<1x1xf32> to vector<1x1xf32>
    %39 = vector.broadcast %38 : vector<1x1xf32> to vector<8x128xf32>
    %40 = vector.broadcast %cst_11 : f32 to vector<8x128xf32>
    %41 = arith.select %37, %39, %40 : vector<8x128xi1>, vector<8x128xf32>
    %c0_12 = arith.constant 0 : index
    %c0_13 = arith.constant 0 : index
    %42 = vector.load %arg3[%c0_12, %c0_13] : memref<8x128xf32, #tpu.memory_space<vmem>>, vector<8x128xf32>
    tpu.vector_store %arg3[%c0_12, %c0_13], %41 {strides = array<i32>} : memref<8x128xf32, #tpu.memory_space<vmem>>, vector<8x128xf32>,
    return
  }
  func.func @transform_0(%arg0: i32) -> (i32, i32) {
    %c0_i32 = arith.constant 0 : i32
    %c0_i32_0 = arith.constant 0 : i32
    return %arg0, %c0_i32 : i32, i32
  }
  func.func @transform_1(%arg0: i32) -> (i32, i32) {
    %c0_i32 = arith.constant 0 : i32
    %c0_i32_0 = arith.constant 0 : i32
    return %arg0, %c0_i32 : i32, i32
  }
  func.func @transform_2(%arg0: i32) -> (i32, i32) {
    %c0_i32 = arith.constant 0 : i32
    %c0_i32_0 = arith.constant 0 : i32
    return %arg0, %c0_i32 : i32, i32
  }
}

</mosaic_0001>

<llo_original>
// kernel: tpu_custom_call.1
$region0: #{tpu_custom_call.1}
  #allocation0 [shape = 'u32[]', space=smem, size = 0x4, offset = 0x4, fixed_abs, tag = 'smem constant byte address 0x4 - core index']
  #allocation1 [shape = 'u32[144,128]{1,0:T(1,128)}', space=vmem, size = 0x12000, scoped, tag = 'internal scratch']
  %s0 = inlined_call_operand.vmem [shape: s32[16,1], index: 0, kind: input, shape index: {}]
  %s1 = inlined_call_operand.vmem [shape: f32[16,32], index: 1, kind: input, shape index: {}]
  %s2 = inlined_call_operand.hbm [shape: f32[8,128], index: 2, kind: output, shape index: {}]
  %s3 = sld [smem:[#allocation0]]
  $region18: #{tpu_custom_call.1} parent=0
    _
  %s5 = ssub.s32 1, %s3
  %s6 = scalar_select 0, %s5, %s3
  $region1: #{tpu_custom_call.1} parent=0
    #allocation2 [shape = 'u8[4096]{0}', space=vmem, size = 0x1000, scoped, tag = 'output window, operand 0, single buffered']
    #allocation3 [shape = 's32[1]{0}', space=sflag, size = 0x4, scoped, tag = 'scoped memory for tpu_custom_call.1']
    %7 = vsyncpa [#allocation3], 0
    // Predicated region
    $region2: #{tpu_custom_call.1} parent=1 // pred_check
      _
    $region3: #{tpu_custom_call.1} parent=1 // pred_check_branch
      %9 = sbr.rel (0) target = $region5
    $region4: #{tpu_custom_call.1} parent=1 // pred_region
      _
    $region5: #{tpu_custom_call.1} parent=1 // pred_fallthru
      _
    // Predicated region
    $region6: #{tpu_custom_call.1} parent=1 // pred_check
      _
    $region7: #{tpu_custom_call.1} parent=1 // pred_check_branch
      %11 = sbr.rel (0) target = $region9
    $region8: #{tpu_custom_call.1} parent=1 // pred_region
      _
    $region9: #{tpu_custom_call.1} parent=1 // pred_fallthru
      _
    %v12 = vld [vmem:[%s1] sm:$0xff]
    %v13 = vld [vmem:[%s1 + $0x8] sm:$0xff]
    %v14 = vld [vmem:[%s0] sm:$0xff]
    %v15 = vld [vmem:[%s0 + $0x8] sm:$0xff]
    %vm16 = vcmask 261120
    %v17 = vsel %vm16, %v12, -inf
    %18 = vmax.xlane.f32.xlu0 %v17
    %v19 = vpop.xlane.xlu0 %18
    %v20 = vsel %vm16, %v13, -inf
    %21 = vmax.xlane.f32.xlu0 %v20
    %v22 = vpop.xlane.xlu0 %21
    %v23 = vsub.f32 %v12, %v19
    %v24 = vsub.f32 %v13, %v22
    %v25 = vmul.f32 %v23, 1.442695
    %v26 = vpow.pop %v25
    %v27 = vmul.f32 %v24, 1.442695
    %v28 = vpow.pop %v27
    %v29 = vsel %vm16, %v26, 0.0
    %30 = vadd.xlane.f32.xlu0 %v29
    %v31 = vpop.xlane.xlu0 %30
    %v32 = vsel %vm16, %v28, 0.0
    %33 = vadd.xlane.f32.xlu0 %v32
    %v34 = vpop.xlane.xlu0 %33
    %v35 = vlog2.pop %v31
    %v36 = vmul.f32 %v35, 0.6931472
    %v37 = vlog2.pop %v34
    %v38 = vmul.f32 %v37, 0.6931472
    %v39 = vlaneseq
    %v40 = vand.u32 %v39, 127
    %41 = vset.pattern.permute.xlu0 0
    %42 = vperm.xlu0 %41, %v14
    %v43 = vpop.permute.xlu0 %42
    %44 = vset.pattern.permute.xlu0 0
    %45 = vperm.xlu0 %44, %v15
    %v46 = vpop.permute.xlu0 %45
    %vm47 = vcmp.eq.s32.totalorder %v40, %v43
    %vm48 = vcmp.eq.s32.totalorder %v40, %v46
    %v49 = vsel %vm47, 0.9, 0.0032258064
    %v50 = vsel %vm48, 0.9, 0.0032258064
    %v51 = vmul.f32 %v49, %v23
    %v52 = vmul.f32 %v50, %v24
    %v53 = vsel %vm16, %v51, 0.0
    %54 = vadd.xlane.f32.xlu0 %v53
    %v55 = vpop.xlane.xlu0 %54
    %v56 = vsel %vm16, %v52, 0.0
    %57 = vadd.xlane.f32.xlu0 %v56
    %v58 = vpop.xlane.xlu0 %57
    %v59 = vsub.f32 %v36, %v55
    %v60 = vsub.f32 %v38, %v58
    %v61 = vlaneseq
    %v62 = vshrl.u32 %v61, 7
    %v63 = vadd.s32 %v62, 8
    %s64 = smul.u32 0, 16
    %v65 = vstv %s64
    %v66 = vadd.s32 %v62, %v65
    %v67 = vadd.s32 %v63, %v65
    %vm68 = vcmp.lt.s32.totalorder %v66, 16
    %vm69 = vcmp.lt.s32.totalorder %v67, 16
    %v70 = vsel %vm68, %v59, 0.0
    %v71 = vsel %vm69, %v60, 0.0
    %v72 = vadd.f32 %v70, %v71
    %v73 = vrot.slane %v72, 4
    %v74 = vadd.f32 %v72, %v73
    %v75 = vrot.slane %v74, 2
    %v76 = vadd.f32 %v74, %v75
    %v77 = vrot.slane %v76, 1
    %v78 = vadd.f32 %v76, %v77
    %vm79 = vcmp.eq.s32.totalorder %v62, 0
    %vm80 = vcmp.eq.s32.totalorder %v40, 0
    %vm81 = vmand %vm79, %vm80
    %v82 = vsel %vm81, %v78, 0.0
    %83 = vst [vmem:[#allocation2] sm:$0xff] %v82
    // Predicated region
    $region10: #{tpu_custom_call.1} parent=1 // pred_check
      _
    $region11: #{tpu_custom_call.1} parent=1 // pred_check_branch
      %85 = sbr.rel (0) target = $region13
    $region12: #{tpu_custom_call.1} parent=1 // pred_region
      %s87 = ssub.s32 128, 128
      %88 = vsyncadd [#allocation3], %s87
      %s90 = sshll.u32 [#allocation2], 4
      %s91 = int_to_ptr.vmem [resolvable:$true] %s90
      %93 = dma.vmem_to_hbm [thread:$0]  %s91, 128, %s2, [#allocation3]
    $region13: #{tpu_custom_call.1} parent=1 // pred_fallthru
      _
    // Predicated region
    $region14: #{tpu_custom_call.1} parent=1 // pred_check
      _
    $region15: #{tpu_custom_call.1} parent=1 // pred_check_branch
      %95 = sbr.rel (0) target = $region17
    $region16: #{tpu_custom_call.1} parent=1 // pred_region
      %96 = dma.done [#allocation3], 128
    $region17: #{tpu_custom_call.1} parent=1 // pred_fallthru
      _
    %97 = vsyncpa [#allocation3], 1

</llo_original>
